<compile_context>
chip_gen: v5e
topology: v5e:2x2
jax: 0.10.0
libtpu: 0.0.40
codegen_flags: <defaults>
</compile_context>

<pallas_src>
import numpy as np
import jax
import jax.numpy as jnp
from jax.experimental import pallas as pl
from jax.experimental.pallas import tpu as pltpu


def _copy_cast_kernel(x_ref, o_ref):
    # one load of the whole lane-dense tile, one unmasked store with the f32 cast fused
    o_ref[...] = x_ref[...].astype(o_ref.dtype)


def _deconcat_slab(x, d_total):
    """Batched copy + float32 cast of the flat observation (B, D_total).

    Returns a (B, D_total) float32 slab; per-key slicing is left to the caller
    (cheap XLA lane slices that fuse into downstream compute).
    """
    assert x.ndim == 2 and x.shape[1] == d_total
    b, d = x.shape

    # ---- (1) f32 fast path: nothing to do, no copy, no custom-call boundary ----
    if x.dtype == jnp.float32:
        return x

    in_item = jnp.dtype(x.dtype).itemsize
    total = b * d
    io_bytes = total * (in_item + 4)

    # ---- (2) small / latency path: let XLA fuse the cast downstream ------------
    if io_bytes <= (1 << 20):
        return x.astype(jnp.float32)

    # ---- (3) large path: lane-dense tiled Pallas copy+cast ---------------------
    # Pick a lane width W (large multiple of 128) that divides B*D so the
    # row-major reshape (B, D) -> (rows, W) is free and stores are unmasked.
    w = None
    for cand in (2048, 1024, 512, 256, 128):
        if total % cand == 0:
            w = cand
            break
    if w is None:
        # cannot present a lane-dense layout -> pure XLA cast (always correct)
        return x.astype(jnp.float32)

    rows = total // w
    # sublane quantum for the *input* dtype (sub-32-bit packs 16/32 rows per vreg)
    sub = {1: 32, 2: 16, 4: 8}.get(in_item, 8)
    if rows % sub != 0:
        return x.astype(jnp.float32)

    # Tile sizing: ~<=2 MiB per tile (in+out), grid >= 8 steps when rows allow,
    # tb a multiple of the sublane quantum and a divisor of rows (no ragged edge).
    per_row_bytes = w * (in_item + 4)
    target_tile_bytes = 2 << 20
    cap_bytes = max(sub, (target_tile_bytes // per_row_bytes) // sub * sub)
    if rows >= 8 * sub:
        cap_grid = max(sub, (rows // 8) // sub * sub)
        cap = min(cap_bytes, cap_grid)
    else:
        cap = cap_bytes

    tb = None
    t = sub
    while t <= cap:
        if rows % t == 0:
            tb = t
        t += sub
    if tb is None:
        return x.astype(jnp.float32)

    grid = (rows // tb,)
    cost = pl.CostEstimate(flops=0, transcendentals=0, bytes_accessed=io_bytes)

    x2 = x.reshape(rows, w)  # free row-major reshape of contiguous data
    out2 = pl.pallas_call(
        _copy_cast_kernel,
        out_shape=jax.ShapeDtypeStruct((rows, w), jnp.float32),
        grid=grid,
        in_specs=[pl.BlockSpec((tb, w), lambda i: (i, 0))],
        out_specs=pl.BlockSpec((tb, w), lambda i: (i, 0)),
        compiler_params=pltpu.CompilerParams(
            dimension_semantics=("parallel",),   # v7x: shard grid steps across both TCs
            vmem_limit_bytes=16 << 20,           # explicit headroom on every generation
        ),
        cost_estimate=cost,
    )(x2)
    return out2.reshape(b, d)


class BaseControllerPallas:
    """
    JAX/Pallas port of BaseController.

    ksp = (keys, states, partitions); `partitions` gives the per-key chunk
    sizes used by deconcater to split a flat observation tensor.
    """

    def __init__(self, ksp):
        self.ksp = ksp
        if ksp is not None:
            self.keys, self.states, self.partitions = ksp
            self.keys_to_idx = {k: i for i, k in enumerate(self.keys)}
            self.sizes = tuple(int(p) for p in self.partitions)
            self.offsets = tuple(int(o) for o in np.cumsum((0,) + self.sizes[:-1]))
            self.d_total = int(sum(self.sizes))
        else:
            self.keys = None
            self.keys_to_idx = None

    # ---- hot path: batched split + float cast --------------------------------
    def deconcat(self, x):
        """x: (B, D_total) -> tuple of (B, d_i) float32 arrays (one per key)."""
        slab = _deconcat_slab(jnp.asarray(x), self.d_total)
        if slab.dtype != jnp.float32:
            slab = slab.astype(jnp.float32)
        # per-key split: plain lane slices on the already-f32 lane-dense slab
        return tuple(
            jax.lax.slice_in_dim(slab, off, off + sz, axis=1)
            for off, sz in zip(self.offsets, self.sizes)
        )

    # ---- forward: same dispatch semantics as the PyTorch module --------------
    def forward(self, x):
        if isinstance(x, tuple):
            pass
        elif isinstance(x, dict):
            x = tuple(x[k] for k in self.keys)
        else:
            x = jnp.asarray(x)
            if x.ndim == 1:
                parts = self.deconcat(x[None, :])
                x = tuple(p[0] for p in parts)
            else:
                # batched flat observation: vectorized split == stack of per-sample splits
                x = self.deconcat(x)
        x = tuple(jnp.asarray(a, dtype=jnp.float32) for a in x)
        return self.forward_tuple(x)

    def forward_tuple(self, x):
        # TODO(synk): abstract in the reference implementation (raises NotImplementedError).
        raise NotImplementedError

    __call__ = forward


if __name__ == "__main__":
    ok = True

    keys = ("position", "velocity", "orientation")
    states = (None, None, None)

    # --- test 1: small f32 input (fast path: no copy, no Pallas) --------------
    partitions = (8, 8, 16)
    ctrl = BaseControllerPallas((keys, states, partitions))
    batch = 2
    d_total = sum(partitions)  # 32
    x = jax.random.normal(jax.random.PRNGKey(0), (batch, d_total), dtype=jnp.float32)
    parts = jax.block_until_ready(ctrl.deconcat(x))
    x_np = np.asarray(x)
    off = 0
    for p, s in zip(parts, partitions):
        ok &= np.array_equal(np.asarray(p), x_np[:, off:off + s])
        ok &= p.shape == (batch, s) and p.dtype == jnp.float32
        off += s

    # --- test 2: small bf16 input (latency path: fused XLA cast + slices) -----
    xb_small = jax.random.normal(jax.random.PRNGKey(0), (batch, d_total), dtype=jnp.bfloat16)
    parts2 = jax.block_until_ready(ctrl.deconcat(xb_small))
    ref_small = np.asarray(xb_small.astype(jnp.float32))
    off = 0
    for p, s in zip(parts2, partitions):
        ok &= np.array_equal(np.asarray(p), ref_small[:, off:off + s])
        ok &= p.dtype == jnp.float32
        off += s

    # --- test 3: larger bf16 batch exercises the lane-dense tiled Pallas path --
    big_partitions = (32, 32, 64)
    big_ctrl = BaseControllerPallas((keys, states, big_partitions))
    bd = sum(big_partitions)  # 128
    bb = 2048
    xb = jax.random.normal(jax.random.PRNGKey(0), (bb, bd), dtype=jnp.bfloat16)
    big_parts = jax.block_until_ready(big_ctrl.deconcat(xb))
    xb_f32 = np.asarray(xb.astype(jnp.float32))
    off = 0
    for p, s in zip(big_parts, big_partitions):
        ok &= np.array_equal(np.asarray(p), xb_f32[:, off:off + s])
        ok &= p.shape == (bb, s) and p.dtype == jnp.float32
        off += s

    # --- test 4: awkward batch (B % 8 != 0, large-ish) takes the safe XLA path --
    odd_ctrl = BaseControllerPallas((keys, states, (32, 32, 32)))
    xo = jax.random.normal(jax.random.PRNGKey(0), (1000, 96), dtype=jnp.bfloat16)
    odd_parts = jax.block_until_ready(odd_ctrl.deconcat(xo))
    xo_f32 = np.asarray(xo.astype(jnp.float32))
    off = 0
    for p, s in zip(odd_parts, (32, 32, 32)):
        ok &= np.array_equal(np.asarray(p), xo_f32[:, off:off + s])
        ok &= p.dtype == jnp.float32
        off += s

    if ok:
        print("KERNEL_OK")
    else:
        print("KERNEL_MISMATCH")
</pallas_src>

<mosaic_0001>
module attributes {stable_mosaic.version = 11 : i64} {
  func.func @_copy_cast_kernel(%arg0: i32, %arg1: memref<16x2048xbf16, #tpu.memory_space<vmem>>, %arg2: memref<16x2048xf32, #tpu.memory_space<vmem>>) attributes {dimension_semantics = [#tpu.dimension_semantics<parallel>], iteration_bounds = array<i64: 8>, scalar_prefetch = 0 : i64, scratch_operands = 0 : i64, tpu.core_type = #tpu.core_type<tc>, window_params = [{transform_indices = @transform_0, window_bounds = array<i64: 16, 2048>}, {transform_indices = @transform_1, window_bounds = array<i64: 16, 2048>}]} {
    %c0 = arith.constant 0 : index
    %c0_0 = arith.constant 0 : index
    %0 = vector.load %arg1[%c0, %c0_0] : memref<16x2048xbf16, #tpu.memory_space<vmem>>, vector<16x2048xbf16>
    %1 = arith.extf %0 : vector<16x2048xbf16> to vector<16x2048xf32>
    %c0_1 = arith.constant 0 : index
    %c0_2 = arith.constant 0 : index
    %2 = vector.load %arg2[%c0_1, %c0_2] : memref<16x2048xf32, #tpu.memory_space<vmem>>, vector<16x2048xf32>
    tpu.vector_store %arg2[%c0_1, %c0_2], %1 {strides = array<i32>} : memref<16x2048xf32, #tpu.memory_space<vmem>>, vector<16x2048xf32>,
    return
  }
  func.func @transform_0(%arg0: i32) -> (i32, i32) {
    %c0_i32 = arith.constant 0 : i32
    %c0_i32_0 = arith.constant 0 : i32
    return %arg0, %c0_i32 : i32, i32
  }
  func.func @transform_1(%arg0: i32) -> (i32, i32) {
    %c0_i32 = arith.constant 0 : i32
    %c0_i32_0 = arith.constant 0 : i32
    return %arg0, %c0_i32 : i32, i32
  }
}

</mosaic_0001>

<llo_original>
// kernel: tpu_custom_call.1
$region0: #{tpu_custom_call.1}
  #allocation0 [shape = 'u32[]', space=smem, size = 0x4, offset = 0x4, fixed_abs, tag = 'smem constant byte address 0x4 - core index']
  #allocation1 [shape = 'u32[72,128]{1,0:T(1,128)}', space=vmem, size = 0x9000, scoped, tag = 'internal scratch']
  %s0 = inlined_call_operand.hbm [shape: bf16[128,2048], index: 0, kind: input, shape index: {}]
  %s1 = inlined_call_operand.hbm [shape: f32[128,2048], index: 1, kind: output, shape index: {}]
  %s2 = sld [smem:[#allocation0]]
  $region41: #{tpu_custom_call.1} parent=0
    _
  %s4 = ssub.s32 1, %s2
  %s5 = scalar_select 0, %s4, %s2
  $region1: #{tpu_custom_call.1} parent=0
    #allocation2 [shape = 'u8[131072]{0}', space=vmem, size = 0x20000, scoped, tag = 'input window, operand 0']
    #allocation3 [shape = 's32[2]{0}', space=sflag, size = 0x8, scoped, tag = 'scoped memory for tpu_custom_call.1']
    #allocation4 [shape = 's32[2]{0}', space=sflag, size = 0x8, scoped, tag = 'scoped memory for tpu_custom_call.1']
    #allocation5 [shape = 'u8[262144]{0}', space=vmem, size = 0x40000, scoped, tag = 'output window, operand 0']
    %6 = vsyncpa [#allocation3], 0
    %s7 = scalar_lea.sflag [#allocation3], 1
    %8 = vsyncpa %s7, 0
    %9 = vsyncpa [#allocation4], 0
    %s10 = scalar_lea.sflag [#allocation4], 1
    %11 = vsyncpa %s10, 0
    loop: start=0, step=1, limit=10
    $region2: #{tpu_custom_call.1} parent=1 // loop_pre_header
      _
    $region3: #{tpu_custom_call.1} parent=1 // loop_header
      %s13 = sphi 0, %s17
      %p14 = scmp.ge.s32.totalorder %s13, 10
      %s23 = sphi 0, %s25
      %s26 = sphi 0, %s23
      %s27 = sphi 0, %s26
      %s43 = sphi 0, %s27
      %s49 = sphi 0, %s51
      %s52 = sphi 0, %s49
      %s53 = sphi 0, %s52
      %s69 = sphi 0, %s53
    $region4: #{tpu_custom_call.1} parent=1 // loop_header_branch
      %16 = sbr.rel (%p14) target = $region8
    $region5: #{tpu_custom_call.1} parent=1 // loop_body
      %s18 = ssub.s32 %s13, 1
      %s19 = ssub.s32 %s13, 2
      %s20 = sadd.s32 %s13, 1
      %s21 = ssub.s32 %s13, %s20
      %p22 = scmp.eq.s32.totalorder %s21, 0
      %s24 = sadd.s32 %s23, 1
      %s25 = scalar_select %p22, %s23, %s24
      %p28 = pneg %p22
      %p29 = scmp.eq.s32.totalorder %s13, 7
      %p30 = por %p28, %p29
      %p31 = scmp.ne.s32.totalorder %s23, %s26
      %p32 = scmp.eq.s32.totalorder %s13, 0
      %p33 = por %p31, %p32
      %p34 = scmp.ne.s32.totalorder %s23, %s26
      %p35 = scmp.eq.s32.totalorder %s18, 7
      %p36 = por %p34, %p35
      %p37 = scmp.ne.s32.totalorder %s26, %s27
      %p38 = scmp.eq.s32.totalorder %s18, 0
      %p39 = por %p37, %p38
      %p40 = scmp.ne.s32.totalorder %s26, %s27
      %p41 = scmp.eq.s32.totalorder %s19, 7
      %p42 = por %p40, %p41
      %p44 = scmp.ne.s32.totalorder %s27, %s43
      %p45 = scmp.eq.s32.totalorder %s19, 0
      %p46 = por %p44, %p45
      %s47 = ssub.s32 %s13, %s20
      %p48 = scmp.eq.s32.totalorder %s47, 0
      %s50 = sadd.s32 %s49, 1
      %s51 = scalar_select %p48, %s49, %s50
      %p54 = pneg %p48
      %p55 = scmp.eq.s32.totalorder %s13, 7
      %p56 = por %p54, %p55
      %p57 = scmp.ne.s32.totalorder %s49, %s52
      %p58 = scmp.eq.s32.totalorder %s13, 0
      %p59 = por %p57, %p58
      %p60 = scmp.ne.s32.totalorder %s49, %s52
      %p61 = scmp.eq.s32.totalorder %s18, 7
      %p62 = por %p60, %p61
      %p63 = scmp.ne.s32.totalorder %s52, %s53
      %p64 = scmp.eq.s32.totalorder %s18, 0
      %p65 = por %p63, %p64
      %p66 = scmp.ne.s32.totalorder %s52, %s53
      %p67 = scmp.eq.s32.totalorder %s19, 7
      %p68 = por %p66, %p67
      %p70 = scmp.ne.s32.totalorder %s53, %s69
      %p71 = scmp.eq.s32.totalorder %s19, 0
      %p72 = por %p70, %p71
      %p73 = scmp.le.s32.totalorder 1, %s13
      %p74 = scmp.lt.s32.totalorder %s13, 9
      %p75 = pnand %p73, %p74
      %p76 = pneg %p75
      // Predicated region
      $region9: #{tpu_custom_call.1} parent=5 // pred_check
        _
      $region10: #{tpu_custom_call.1} parent=5 // pred_check_branch
        %78 = sbr.rel (%p75) target = $region12
      $region11: #{tpu_custom_call.1} parent=5 // pred_region
        %s79 = ssub.s32 %s13, 1
      $region12: #{tpu_custom_call.1} parent=5 // pred_fallthru
        _
      %p80 = scmp.lt.s32.totalorder %s13, 8
      // Predicated region
      $region13: #{tpu_custom_call.1} parent=5 // pred_check
        %p81 = pneg %p80
      $region14: #{tpu_custom_call.1} parent=5 // pred_check_branch
        %83 = sbr.rel (%p81) target = $region16
      $region15: #{tpu_custom_call.1} parent=5 // pred_region
        // Predicated region
        $region17: #{tpu_custom_call.1} parent=15 // pred_check
          %p84 = pneg %p33
        $region18: #{tpu_custom_call.1} parent=15 // pred_check_branch
          %86 = sbr.rel (%p84) target = $region20
        $region19: #{tpu_custom_call.1} parent=15 // pred_region
          %s87 = sand.u32 %s23, 1
          %s88 = scalar_lea.sflag [#allocation3], %s87
          %s89 = sand.u32 %s23, 1
          %s90 = smul.addr %s89, 128
          %s91 = scalar_lea.vmem [#allocation2], %s90
          %s92 = smul.u32 2, %s13
          %94 = vsyncadd %s88, 0
          %s95 = smul.addr %s92, 16
          %s96 = smul.addr %s95, 4
          %s97 = scalar_lea.hbm %s0, %s96
          %s98 = sshll.u32 %s97, 4
          %s99 = int_to_ptr.hbm [resolvable:$true] %s98
          %s100 = sshll.u32 %s91, 4
          %s101 = int_to_ptr.vmem [resolvable:$true] %s100
          %106 = dma.hbm_to_vmem [thread:$0]  %s99, 2048, %s101, %s88, 1024, 1024, 64
        $region20: #{tpu_custom_call.1} parent=15 // pred_fallthru
          _
      $region16: #{tpu_custom_call.1} parent=5 // pred_fallthru
        _
      %p107 = scmp.le.s32.totalorder 1, %s13
      %p108 = scmp.lt.s32.totalorder %s13, 9
      %p109 = pnand %p107, %p108
      %p110 = pneg %p109
      // Predicated region
      $region21: #{tpu_custom_call.1} parent=5 // pred_check
        _
      $region22: #{tpu_custom_call.1} parent=5 // pred_check_branch
        %112 = sbr.rel (%p109) target = $region24
      $region23: #{tpu_custom_call.1} parent=5 // pred_region
        %s113 = ssub.s32 %s13, 1
        %s114 = sand.u32 %s26, 1
        %s115 = scalar_lea.sflag [#allocation3], %s114
        %s116 = sand.u32 %s26, 1
        %s117 = smul.addr %s116, 128
        %s118 = scalar_lea.vmem [#allocation2], %s117
        // Predicated region
        $region25: #{tpu_custom_call.1} parent=23 // pred_check
          %p119 = pneg %p39
        $region26: #{tpu_custom_call.1} parent=23 // pred_check_branch
          %121 = sbr.rel (%p119) target = $region28
        $region27: #{tpu_custom_call.1} parent=23 // pred_region
          %123 = dma.done %s115, 2048
        $region28: #{tpu_custom_call.1} parent=23 // pred_fallthru
          _
        %s124 = sand.u32 %s26, 1
        %s125 = scalar_lea.sflag [#allocation3], %s124
        %s126 = sand.u32 %s26, 1
        %s127 = smul.addr %s126, 128
        %s128 = scalar_lea.vmem [#allocation2], %s127
        %p129 = pneg %p39
        %p130 = pneg %p36
        %p131 = pneg %p65
        %p132 = pneg %p62
        %s133 = sand.u32 %s52, 1
        %s134 = scalar_lea.sflag [#allocation4], %s133
        %s135 = sand.u32 %s52, 1
        %s136 = smul.addr %s135, 256
        %s137 = scalar_lea.vmem [#allocation5], %s136
        %s138 = smul.u32 2, %s18
        %s139 = smul.u32 2, %s18
        %v140 = vld [vmem:[%s118] sm:$0xff]
        %v141 = vld [vmem:[%s118 + $0x8] sm:$0xff]
        %v142 = vld [vmem:[%s118 + $0x10] sm:$0xff]
        %v143 = vld [vmem:[%s118 + $0x18] sm:$0xff]
        %v144 = vld [vmem:[%s118 + $0x20] sm:$0xff]
        %v145 = vld [vmem:[%s118 + $0x28] sm:$0xff]
        %v146 = vld [vmem:[%s118 + $0x30] sm:$0xff]
        %v147 = vld [vmem:[%s118 + $0x38] sm:$0xff]
        %v148 = vld [vmem:[%s118 + $0x40] sm:$0xff]
        %v149 = vld [vmem:[%s118 + $0x48] sm:$0xff]
        %v150 = vld [vmem:[%s118 + $0x50] sm:$0xff]
        %v151 = vld [vmem:[%s118 + $0x58] sm:$0xff]
        %v152 = vld [vmem:[%s118 + $0x60] sm:$0xff]
        %v153 = vld [vmem:[%s118 + $0x68] sm:$0xff]
        %v154 = vld [vmem:[%s118 + $0x70] sm:$0xff]
        %v155 = vld [vmem:[%s118 + $0x78] sm:$0xff]
        %v156 = vunpack.c.l.bf16 %v140
        %v157 = vunpack.c.h.bf16 %v140
        %v158 = vunpack.c.l.bf16 %v141
        %v159 = vunpack.c.h.bf16 %v141
        %v160 = vunpack.c.l.bf16 %v142
        %v161 = vunpack.c.h.bf16 %v142
        %v162 = vunpack.c.l.bf16 %v143
        %v163 = vunpack.c.h.bf16 %v143
        %v164 = vunpack.c.l.bf16 %v144
        %v165 = vunpack.c.h.bf16 %v144
        %v166 = vunpack.c.l.bf16 %v145
        %v167 = vunpack.c.h.bf16 %v145
        %v168 = vunpack.c.l.bf16 %v146
        %v169 = vunpack.c.h.bf16 %v146
        %v170 = vunpack.c.l.bf16 %v147
        %v171 = vunpack.c.h.bf16 %v147
        %v172 = vunpack.c.l.bf16 %v148
        %v173 = vunpack.c.h.bf16 %v148
        %v174 = vunpack.c.l.bf16 %v149
        %v175 = vunpack.c.h.bf16 %v149
        %v176 = vunpack.c.l.bf16 %v150
        %v177 = vunpack.c.h.bf16 %v150
        %v178 = vunpack.c.l.bf16 %v151
        %v179 = vunpack.c.h.bf16 %v151
        %v180 = vunpack.c.l.bf16 %v152
        %v181 = vunpack.c.h.bf16 %v152
        %v182 = vunpack.c.l.bf16 %v153
        %v183 = vunpack.c.h.bf16 %v153
        %v184 = vunpack.c.l.bf16 %v154
        %v185 = vunpack.c.h.bf16 %v154
        %v186 = vunpack.c.l.bf16 %v155
        %v187 = vunpack.c.h.bf16 %v155
        %188 = vst [vmem:[%s137] sm:$0xff] %v156
        %189 = vst [vmem:[%s137 + $0x8] sm:$0xff] %v157
        %190 = vst [vmem:[%s137 + $0x10] sm:$0xff] %v158
        %191 = vst [vmem:[%s137 + $0x18] sm:$0xff] %v159
        %192 = vst [vmem:[%s137 + $0x20] sm:$0xff] %v160
        %193 = vst [vmem:[%s137 + $0x28] sm:$0xff] %v161
        %194 = vst [vmem:[%s137 + $0x30] sm:$0xff] %v162
        %195 = vst [vmem:[%s137 + $0x38] sm:$0xff] %v163
        %196 = vst [vmem:[%s137 + $0x40] sm:$0xff] %v164
        %197 = vst [vmem:[%s137 + $0x48] sm:$0xff] %v165
        %198 = vst [vmem:[%s137 + $0x50] sm:$0xff] %v166
        %199 = vst [vmem:[%s137 + $0x58] sm:$0xff] %v167
        %200 = vst [vmem:[%s137 + $0x60] sm:$0xff] %v168
        %201 = vst [vmem:[%s137 + $0x68] sm:$0xff] %v169
        %202 = vst [vmem:[%s137 + $0x70] sm:$0xff] %v170
        %203 = vst [vmem:[%s137 + $0x78] sm:$0xff] %v171
        %204 = vst [vmem:[%s137 + $0x80] sm:$0xff] %v172
        %205 = vst [vmem:[%s137 + $0x88] sm:$0xff] %v173
        %206 = vst [vmem:[%s137 + $0x90] sm:$0xff] %v174
        %207 = vst [vmem:[%s137 + $0x98] sm:$0xff] %v175
        %208 = vst [vmem:[%s137 + $0xa0] sm:$0xff] %v176
        %209 = vst [vmem:[%s137 + $0xa8] sm:$0xff] %v177
        %210 = vst [vmem:[%s137 + $0xb0] sm:$0xff] %v178
        %211 = vst [vmem:[%s137 + $0xb8] sm:$0xff] %v179
        %212 = vst [vmem:[%s137 + $0xc0] sm:$0xff] %v180
        %213 = vst [vmem:[%s137 + $0xc8] sm:$0xff] %v181
        %214 = vst [vmem:[%s137 + $0xd0] sm:$0xff] %v182
        %215 = vst [vmem:[%s137 + $0xd8] sm:$0xff] %v183
        %216 = vst [vmem:[%s137 + $0xe0] sm:$0xff] %v184
        %217 = vst [vmem:[%s137 + $0xe8] sm:$0xff] %v185
        %218 = vst [vmem:[%s137 + $0xf0] sm:$0xff] %v186
        %219 = vst [vmem:[%s137 + $0xf8] sm:$0xff] %v187
        %s220 = sand.u32 %s52, 1
        %s221 = scalar_lea.sflag [#allocation4], %s220
        %s222 = sand.u32 %s52, 1
        %s223 = smul.addr %s222, 256
        %s224 = scalar_lea.vmem [#allocation5], %s223
        // Predicated region
        $region29: #{tpu_custom_call.1} parent=23 // pred_check
          %p225 = pneg %p62
        $region30: #{tpu_custom_call.1} parent=23 // pred_check_branch
          %227 = sbr.rel (%p225) target = $region32
        $region31: #{tpu_custom_call.1} parent=23 // pred_region
          %s228 = smul.u32 2, %s18
          %230 = vsyncadd %s221, 0
          %s231 = smul.addr %s228, 16
          %s232 = smul.addr %s231, 8
          %s233 = scalar_lea.hbm %s1, %s232
          %s234 = sshll.u32 %s224, 4
          %s235 = int_to_ptr.vmem [resolvable:$true] %s234
          %s236 = sshll.u32 %s233, 4
          %s237 = int_to_ptr.hbm [resolvable:$true] %s236
          %242 = dma.vmem_to_hbm [thread:$0]  %s235, 4096, %s237, %s221, 2048, 2048, 128
        $region32: #{tpu_custom_call.1} parent=23 // pred_fallthru
          _
      $region24: #{tpu_custom_call.1} parent=5 // pred_fallthru
        _
      %p243 = scmp.le.s32.totalorder 2, %s13
      // Predicated region
      $region33: #{tpu_custom_call.1} parent=5 // pred_check
        %p244 = pneg %p243
      $region34: #{tpu_custom_call.1} parent=5 // pred_check_branch
        %246 = sbr.rel (%p244) target = $region36
      $region35: #{tpu_custom_call.1} parent=5 // pred_region
        %s247 = ssub.s32 %s13, 2
        // Predicated region
        $region37: #{tpu_custom_call.1} parent=35 // pred_check
          %p248 = pneg %p68
        $region38: #{tpu_custom_call.1} parent=35 // pred_check_branch
          %250 = sbr.rel (%p248) target = $region40
        $region39: #{tpu_custom_call.1} parent=35 // pred_region
          %s251 = sand.u32 %s53, 1
          %s252 = scalar_lea.sflag [#allocation4], %s251
          %s253 = sand.u32 %s53, 1
          %s254 = smul.addr %s253, 256
          %s255 = scalar_lea.vmem [#allocation5], %s254
          %257 = dma.done %s252, 4096
        $region40: #{tpu_custom_call.1} parent=35 // pred_fallthru
          _
      $region36: #{tpu_custom_call.1} parent=5 // pred_fallthru
        _
    $region6: #{tpu_custom_call.1} parent=1 // loop_footer
      %s17 = sadd.s32 1, %s13
    $region7: #{tpu_custom_call.1} parent=1 // loop_footer_branch
      %12 = sbr.rel target = $region3
    $region8: #{tpu_custom_call.1} parent=1 // loop_exit
      _
    %258 = vsyncpa [#allocation3], 1
    %s259 = scalar_lea.sflag [#allocation3], 1
    %260 = vsyncpa %s259, 1
    %261 = vsyncpa [#allocation4], 1
    %s262 = scalar_lea.sflag [#allocation4], 1
    %263 = vsyncpa %s262, 1

</llo_original>
